<compile_context>
chip_gen: v7x
topology: tpu7x:2x2x1
jax: 0.10.0
libtpu: 0.0.40
codegen_flags: <defaults>
</compile_context>

<pallas_src>
import jax
import jax.numpy as jnp
import numpy as np
from jax.experimental import pallas as pl
from jax.experimental.pallas import tpu as pltpu


def _cam_kernel(x_ref, w1_ref, shift_ref, w2_ref, o_ref):
    """Per-voxel channel-MLP + sigmoid on one (C, TM) spatial tile.

    x_ref     : VMEM (C, TM)       input tile (batch dim squeezed)
    w1_ref    : VMEM (Crp, C)      first 1x1x1 conv weight with BN scale folded in
    shift_ref : VMEM (Crp, 1)      folded BatchNorm shift (beta - mean * scale)
    w2_ref    : VMEM (C, Crp)      second 1x1x1 conv weight (zero-padded cols)
    o_ref     : VMEM (C, TM)       output tile
    """
    x = x_ref[...]                                                     # (C, TM)
    h = jnp.dot(w1_ref[...], x, preferred_element_type=jnp.float32)   # (Crp, TM)  MXU
    h = jnp.maximum(h + shift_ref[...], 0.0)                          # BN shift + ReLU (VPU)
    y = jnp.dot(w2_ref[...], h, preferred_element_type=jnp.float32)   # (C, TM)    MXU
    o_ref[...] = jax.nn.sigmoid(y).astype(o_ref.dtype)                # sigmoid (EUP)


def channel_attention_forward(x, w1, bn_gamma, bn_beta, bn_mean, bn_var, w2, eps=1e-5):
    """JAX/Pallas equivalent of ChannelAttentionModule.forward (eval-mode BatchNorm).

    x  : (n, C, D, H, W)
    w1 : (Cr, C)   (Conv3d weight with the 1x1x1 kernel dims squeezed)
    w2 : (C, Cr)
    bn_gamma/beta/mean/var : (Cr,)
    """
    n, c, d, h, w = x.shape
    cr = w1.shape[0]
    m = d * h * w

    # Contiguous reshape only -- no transpose, no extra HBM pass.
    xf = x.reshape(n, c, m)

    # Fold BatchNorm3d (inference) scale into W1; keep only the additive shift.
    scale_v = (bn_gamma / jnp.sqrt(bn_var + eps)).astype(jnp.float32)     # (Cr,)
    shift_v = (bn_beta - bn_mean * scale_v).astype(jnp.float32)           # (Cr,)
    w1f = w1.astype(jnp.float32) * scale_v[:, None]                       # (Cr, C)
    w2f = w2.astype(jnp.float32)                                          # (C, Cr)

    # Pad Cr up to a whole sublane group (8) with neutral rows/cols (zero rows in W1,
    # zero shift, zero cols in W2 -> padded rows contribute exactly 0 to the output).
    cr_pad = ((cr + 7) // 8) * 8
    if cr_pad != cr:
        w1f = jnp.concatenate(
            [w1f, jnp.zeros((cr_pad - cr, c), jnp.float32)], axis=0)
        shift_v = jnp.concatenate(
            [shift_v, jnp.zeros((cr_pad - cr,), jnp.float32)], axis=0)
        w2f = jnp.concatenate(
            [w2f, jnp.zeros((c, cr_pad - cr), jnp.float32)], axis=1)
    shift = shift_v.reshape(cr_pad, 1)

    # Lane-dense spatial tile: target ~2 MiB per x block, multiple of 128 lanes.
    # No wrapper-side padding: cdiv grid + masked writeback handle a ragged tail.
    target_bytes = 2 * 1024 * 1024
    tm_cap = max(128, (target_bytes // (c * x.dtype.itemsize)) // 128 * 128)
    tm = min(tm_cap, 128 * pl.cdiv(m, 128))
    num_tiles = pl.cdiv(m, tm)

    out = pl.pallas_call(
        _cam_kernel,
        out_shape=jax.ShapeDtypeStruct((n, c, m), x.dtype),
        grid_spec=pltpu.PrefetchScalarGridSpec(
            num_scalar_prefetch=0,
            grid=(n, num_tiles),
            in_specs=[
                pl.BlockSpec((pl.Squeezed(), c, tm), lambda b, j: (b, 0, j)),  # x tile
                pl.BlockSpec((cr_pad, c), lambda b, j: (0, 0)),                # W1*scale (resident)
                pl.BlockSpec((cr_pad, 1), lambda b, j: (0, 0)),                # BN shift (resident)
                pl.BlockSpec((c, cr_pad), lambda b, j: (0, 0)),                # W2 (resident)
            ],
            out_specs=pl.BlockSpec((pl.Squeezed(), c, tm), lambda b, j: (b, 0, j)),
        ),
        compiler_params=pltpu.CompilerParams(
            dimension_semantics=("parallel", "parallel"),
        ),
    )(xf, w1f, shift, w2f)

    return out.reshape(n, c, d, h, w)


def _reference(x, w1, bn_gamma, bn_beta, bn_mean, bn_var, w2, eps=1e-5):
    """Pure-JAX reference mirroring the PyTorch module (eval-mode BatchNorm3d)."""
    hmid = jnp.einsum("oc,ncdhw->nodhw", w1, x)
    hmid = (hmid - bn_mean[None, :, None, None, None]) / jnp.sqrt(
        bn_var[None, :, None, None, None] + eps)
    hmid = hmid * bn_gamma[None, :, None, None, None] + bn_beta[None, :, None, None, None]
    hmid = jnp.maximum(hmid, 0.0)
    y = jnp.einsum("co,nodhw->ncdhw", w2, hmid)
    return jax.nn.sigmoid(y)


if __name__ == "__main__":
    key = jax.random.PRNGKey(0)
    k_x, k_w1, k_w2, k_g, k_b, k_m, k_v = jax.random.split(key, 7)

    # Small shapes consistent with the module: batch=2, channel=64, ratio=16 -> Cr=4,
    # temporal depth=4, spatial 8x8.
    n, c, ratio = 2, 64, 16
    cr = c // ratio
    d, h, w = 4, 8, 8
    eps = 1e-5

    x = jax.random.normal(k_x, (n, c, d, h, w), dtype=jnp.float32)
    w1 = jax.random.normal(k_w1, (cr, c), dtype=jnp.float32) * 0.1   # Conv3d(C->Cr, 1x1x1)
    w2 = jax.random.normal(k_w2, (c, cr), dtype=jnp.float32) * 0.1   # Conv3d(Cr->C, 1x1x1)
    bn_gamma = jax.random.uniform(k_g, (cr,), jnp.float32, 0.5, 1.5)
    bn_beta = jax.random.normal(k_b, (cr,), dtype=jnp.float32) * 0.1
    bn_mean = jax.random.normal(k_m, (cr,), dtype=jnp.float32) * 0.1
    bn_var = jax.random.uniform(k_v, (cr,), jnp.float32, 0.5, 1.5)
    # TODO(synk): training-mode BatchNorm3d (batch statistics) is not implemented;
    # eval-mode (running stats folded into W1 scale / shift) is used, matching inference.

    out = channel_attention_forward(x, w1, bn_gamma, bn_beta, bn_mean, bn_var, w2, eps)
    out = jax.block_until_ready(out)

    ref = _reference(x, w1, bn_gamma, bn_beta, bn_mean, bn_var, w2, eps)
    assert out.shape == ref.shape == (n, c, d, h, w)
    np.testing.assert_allclose(np.asarray(out), np.asarray(ref), rtol=1e-3, atol=2e-3)

    print("KERNEL_OK")
</pallas_src>

<mosaic_0001>
module attributes {stable_mosaic.version = 11 : i64} {
  func.func @_cam_kernel(%arg0: i32, %arg1: i32, %arg2: memref<1x64x256xf32, #tpu.memory_space<vmem>>, %arg3: memref<8x64xf32, #tpu.memory_space<vmem>>, %arg4: memref<8x1xf32, #tpu.memory_space<vmem>>, %arg5: memref<64x8xf32, #tpu.memory_space<vmem>>, %arg6: memref<1x64x256xf32, #tpu.memory_space<vmem>>) attributes {dimension_semantics = [#tpu.dimension_semantics<parallel>, #tpu.dimension_semantics<parallel>], iteration_bounds = array<i64: 2, 1>, scalar_prefetch = 0 : i64, scratch_operands = 0 : i64, tpu.core_type = #tpu.core_type<tc>, window_params = [{transform_indices = @transform_0, window_bounds = array<i64: 1, 64, 256>}, {pipeline_mode = #tpu.pipeline_mode<synchronous>, transform_indices = @transform_1, window_bounds = array<i64: 8, 64>}, {pipeline_mode = #tpu.pipeline_mode<synchronous>, transform_indices = @transform_2, window_bounds = array<i64: 8, 1>}, {pipeline_mode = #tpu.pipeline_mode<synchronous>, transform_indices = @transform_3, window_bounds = array<i64: 64, 8>}, {transform_indices = @transform_4, window_bounds = array<i64: 1, 64, 256>}]} {
    %c0 = arith.constant 0 : index
    %c0_0 = arith.constant 0 : index
    %c0_1 = arith.constant 0 : index
    %0 = vector.load %arg2[%c0, %c0_0, %c0_1] : memref<1x64x256xf32, #tpu.memory_space<vmem>>, vector<1x64x256xf32>
    %1 = vector.shape_cast %0 : vector<1x64x256xf32> to vector<64x256xf32>
    %c0_2 = arith.constant 0 : index
    %c0_3 = arith.constant 0 : index
    %2 = vector.load %arg3[%c0_2, %c0_3] : memref<8x64xf32, #tpu.memory_space<vmem>>, vector<8x64xf32>
    %cst = arith.constant dense<0.000000e+00> : vector<8x256xf32>
    %3 = tpu.matmul %2, %1, %cst {dimension_numbers = #tpu.dot_dimension_numbers<[1], [0], [0], [1], [0, 0, 1, 1], [], []>} : vector<8x64xf32>, vector<64x256xf32>, vector<8x256xf32> -> vector<8x256xf32>
    %c0_4 = arith.constant 0 : index
    %c0_5 = arith.constant 0 : index
    %4 = vector.load %arg4[%c0_4, %c0_5] : memref<8x1xf32, #tpu.memory_space<vmem>>, vector<8x1xf32>
    %5 = vector.broadcast %4 : vector<8x1xf32> to vector<8x256xf32>
    %6 = arith.addf %3, %5 : vector<8x256xf32>
    %cst_6 = arith.constant 0.000000e+00 : f32
    %7 = vector.broadcast %cst_6 : f32 to vector<8x256xf32>
    %8 = arith.maximumf %6, %7 : vector<8x256xf32>
    %c0_7 = arith.constant 0 : index
    %c0_8 = arith.constant 0 : index
    %9 = vector.load %arg5[%c0_7, %c0_8] : memref<64x8xf32, #tpu.memory_space<vmem>>, vector<64x8xf32>
    %cst_9 = arith.constant dense<0.000000e+00> : vector<64x256xf32>
    %10 = tpu.matmul %9, %8, %cst_9 {dimension_numbers = #tpu.dot_dimension_numbers<[1], [0], [0], [1], [0, 0, 1, 1], [], []>} : vector<64x8xf32>, vector<8x256xf32>, vector<64x256xf32> -> vector<64x256xf32>
    %11 = arith.negf %10 : vector<64x256xf32>
    %12 = math.exp %11 : vector<64x256xf32>
    %cst_10 = arith.constant 1.000000e+00 : f32
    %13 = vector.broadcast %cst_10 : f32 to vector<64x256xf32>
    %14 = arith.addf %13, %12 : vector<64x256xf32>
    %15 = arith.divf %13, %14 : vector<64x256xf32>
    %c0_11 = arith.constant 0 : index
    %c0_12 = arith.constant 0 : index
    %c0_13 = arith.constant 0 : index
    %16 = vector.load %arg6[%c0_11, %c0_12, %c0_13] : memref<1x64x256xf32, #tpu.memory_space<vmem>>, vector<1x64x256xf32>
    %17 = vector.shape_cast %16 : vector<1x64x256xf32> to vector<64x256xf32>
    %18 = vector.shape_cast %15 : vector<64x256xf32> to vector<1x64x256xf32>
    tpu.vector_store %arg6[%c0_11, %c0_12, %c0_13], %18 {strides = array<i32>} : memref<1x64x256xf32, #tpu.memory_space<vmem>>, vector<1x64x256xf32>,
    return
  }
  func.func @transform_0(%arg0: i32, %arg1: i32) -> (i32, i32, i32) {
    %c0_i32 = arith.constant 0 : i32
    %c0_i32_0 = arith.constant 0 : i32
    return %arg0, %c0_i32, %arg1 : i32, i32, i32
  }
  func.func @transform_1(%arg0: i32, %arg1: i32) -> (i32, i32) {
    %c0_i32 = arith.constant 0 : i32
    %c0_i32_0 = arith.constant 0 : i32
    %c0_i32_1 = arith.constant 0 : i32
    return %c0_i32, %c0_i32_0 : i32, i32
  }
  func.func @transform_2(%arg0: i32, %arg1: i32) -> (i32, i32) {
    %c0_i32 = arith.constant 0 : i32
    %c0_i32_0 = arith.constant 0 : i32
    %c0_i32_1 = arith.constant 0 : i32
    return %c0_i32, %c0_i32_0 : i32, i32
  }
  func.func @transform_3(%arg0: i32, %arg1: i32) -> (i32, i32) {
    %c0_i32 = arith.constant 0 : i32
    %c0_i32_0 = arith.constant 0 : i32
    %c0_i32_1 = arith.constant 0 : i32
    return %c0_i32, %c0_i32_0 : i32, i32
  }
  func.func @transform_4(%arg0: i32, %arg1: i32) -> (i32, i32, i32) {
    %c0_i32 = arith.constant 0 : i32
    %c0_i32_0 = arith.constant 0 : i32
    return %arg0, %c0_i32, %arg1 : i32, i32, i32
  }
}

</mosaic_0001>

<llo_original>
// kernel: tpu_custom_call.1
$region0: #{tpu_custom_call.1}
  #allocation0 [shape = 'u32[]', space=smem, size = 0x4, offset = 0x4, fixed_abs, tag = 'smem constant byte address 0x4 - core index']
  #allocation1 [shape = 'u32[144,128]{1,0:T(1,128)}', space=vmem, size = 0x12000, scoped, tag = 'internal scratch']
  %s0 = inlined_call_operand.hbm [shape: f32[2,64,256], index: 0, kind: input, shape index: {}]
  %s1 = inlined_call_operand.vmem [shape: f32[8,64], index: 1, kind: input, shape index: {}]
  %s2 = inlined_call_operand.vmem [shape: f32[8,1], index: 2, kind: input, shape index: {}]
  %s3 = inlined_call_operand.vmem [shape: f32[64,8], index: 3, kind: input, shape index: {}]
  %s4 = inlined_call_operand.hbm [shape: f32[2,64,256], index: 4, kind: output, shape index: {}]
  %s5 = sld [smem:[#allocation0]]
  $region53: #{tpu_custom_call.1} parent=0
    _
  %s7 = ssub.s32 1, %s5
  %s8 = scalar_select 0, %s7, %s5
  $region1: #{tpu_custom_call.1} parent=0
    #allocation2 [shape = 'u8[131072]{0}', space=vmem, size = 0x20000, scoped, tag = 'input window, operand 0']
    #allocation3 [shape = 's32[2]{0}', space=sflag, size = 0x8, scoped, tag = 'scoped memory for tpu_custom_call.1']
    #allocation4 [shape = 's32[2]{0}', space=sflag, size = 0x8, scoped, tag = 'scoped memory for tpu_custom_call.1']
    #allocation5 [shape = 'u8[131072]{0}', space=vmem, size = 0x20000, scoped, tag = 'output window, operand 0']
    %9 = vsyncpa [#allocation3], 0
    %s10 = scalar_lea.sflag [#allocation3], 1
    %11 = vsyncpa %s10, 0
    %12 = vsyncpa [#allocation4], 0
    %s13 = scalar_lea.sflag [#allocation4], 1
    %14 = vsyncpa %s13, 0
    loop: start=0, step=1, limit=4
    $region2: #{tpu_custom_call.1} parent=1 // loop_pre_header
      _
    $region3: #{tpu_custom_call.1} parent=1 // loop_header
      %s16 = sphi 0, %s20
      %p17 = scmp.ge.s32.totalorder %s16, 4
      %s23 = sphi 0, %s35
      %s24 = sphi 0, %s31
      %s25 = sphi 0, %s23
      %s26 = sphi 0, %s24
      %s27 = sphi 0, %s25
      %s28 = sphi 0, %s26
      %s40 = sphi 0, %s42
      %s43 = sphi 0, %s40
      %s44 = sphi 0, %s43
      %s60 = sphi 0, %s44
      %s64 = sphi 0, %s64
      %s66 = sphi 0, %s64
      %s67 = sphi 0, %s66
      %s81 = sphi 0, %s67
      %s85 = sphi 0, %s85
      %s87 = sphi 0, %s85
      %s88 = sphi 0, %s87
      %s102 = sphi 0, %s88
      %s106 = sphi 0, %s106
      %s108 = sphi 0, %s106
      %s109 = sphi 0, %s108
      %s123 = sphi 0, %s109
      %s131 = sphi 0, %s133
      %s134 = sphi 0, %s131
      %s135 = sphi 0, %s134
      %s151 = sphi 0, %s135
    $region4: #{tpu_custom_call.1} parent=1 // loop_header_branch
      %19 = sbr.rel (%p17) target = $region8
    $region5: #{tpu_custom_call.1} parent=1 // loop_body
      %s21 = ssub.s32 %s16, 1
      %s22 = ssub.s32 %s16, 2
      %s29 = sadd.s32 1, %s24
      %p30 = scmp.ge.s32.totalorder %s29, 1
      %s31 = scalar_select %p30, 0, %s29
      %s32 = sadd.s32 1, %s23
      %s33 = scalar_select %p30, %s32, %s23
      %p34 = scmp.ge.s32.totalorder %s33, 2
      %s35 = scalar_select %p34, 0, %s33
      %s36 = ssub.s32 %s23, %s35
      %s37 = ssub.s32 %s24, %s31
      %s38 = sor.u32 %s36, %s37
      %p39 = scmp.eq.s32.totalorder %s38, 0
      %s41 = sadd.s32 %s40, 1
      %s42 = scalar_select %p39, %s40, %s41
      %p45 = pneg %p39
      %p46 = scmp.eq.s32.totalorder %s16, 1
      %p47 = por %p45, %p46
      %p48 = scmp.ne.s32.totalorder %s40, %s43
      %p49 = scmp.eq.s32.totalorder %s16, 0
      %p50 = por %p48, %p49
      %p51 = scmp.ne.s32.totalorder %s40, %s43
      %p52 = scmp.eq.s32.totalorder %s21, 1
      %p53 = por %p51, %p52
      %p54 = scmp.ne.s32.totalorder %s43, %s44
      %p55 = scmp.eq.s32.totalorder %s21, 0
      %p56 = por %p54, %p55
      %p57 = scmp.ne.s32.totalorder %s43, %s44
      %p58 = scmp.eq.s32.totalorder %s22, 1
      %p59 = por %p57, %p58
      %p61 = scmp.ne.s32.totalorder %s44, %s60
      %p62 = scmp.eq.s32.totalorder %s22, 0
      %p63 = por %p61, %p62
      %s65 = sadd.s32 %s64, 1
      %p68 = scmp.eq.s32.totalorder %s16, 1
      %p69 = scmp.ne.s32.totalorder %s64, %s66
      %p70 = scmp.eq.s32.totalorder %s16, 0
      %p71 = por %p69, %p70
      %p72 = scmp.ne.s32.totalorder %s64, %s66
      %p73 = scmp.eq.s32.totalorder %s21, 1
      %p74 = por %p72, %p73
      %p75 = scmp.ne.s32.totalorder %s66, %s67
      %p76 = scmp.eq.s32.totalorder %s21, 0
      %p77 = por %p75, %p76
      %p78 = scmp.ne.s32.totalorder %s66, %s67
      %p79 = scmp.eq.s32.totalorder %s22, 1
      %p80 = por %p78, %p79
      %p82 = scmp.ne.s32.totalorder %s67, %s81
      %p83 = scmp.eq.s32.totalorder %s22, 0
      %p84 = por %p82, %p83
      %s86 = sadd.s32 %s85, 1
      %p89 = scmp.eq.s32.totalorder %s16, 1
      %p90 = scmp.ne.s32.totalorder %s85, %s87
      %p91 = scmp.eq.s32.totalorder %s16, 0
      %p92 = por %p90, %p91
      %p93 = scmp.ne.s32.totalorder %s85, %s87
      %p94 = scmp.eq.s32.totalorder %s21, 1
      %p95 = por %p93, %p94
      %p96 = scmp.ne.s32.totalorder %s87, %s88
      %p97 = scmp.eq.s32.totalorder %s21, 0
      %p98 = por %p96, %p97
      %p99 = scmp.ne.s32.totalorder %s87, %s88
      %p100 = scmp.eq.s32.totalorder %s22, 1
      %p101 = por %p99, %p100
      %p103 = scmp.ne.s32.totalorder %s88, %s102
      %p104 = scmp.eq.s32.totalorder %s22, 0
      %p105 = por %p103, %p104
      %s107 = sadd.s32 %s106, 1
      %p110 = scmp.eq.s32.totalorder %s16, 1
      %p111 = scmp.ne.s32.totalorder %s106, %s108
      %p112 = scmp.eq.s32.totalorder %s16, 0
      %p113 = por %p111, %p112
      %p114 = scmp.ne.s32.totalorder %s106, %s108
      %p115 = scmp.eq.s32.totalorder %s21, 1
      %p116 = por %p114, %p115
      %p117 = scmp.ne.s32.totalorder %s108, %s109
      %p118 = scmp.eq.s32.totalorder %s21, 0
      %p119 = por %p117, %p118
      %p120 = scmp.ne.s32.totalorder %s108, %s109
      %p121 = scmp.eq.s32.totalorder %s22, 1
      %p122 = por %p120, %p121
      %p124 = scmp.ne.s32.totalorder %s109, %s123
      %p125 = scmp.eq.s32.totalorder %s22, 0
      %p126 = por %p124, %p125
      %s127 = ssub.s32 %s23, %s35
      %s128 = ssub.s32 %s24, %s31
      %s129 = sor.u32 %s127, %s128
      %p130 = scmp.eq.s32.totalorder %s129, 0
      %s132 = sadd.s32 %s131, 1
      %s133 = scalar_select %p130, %s131, %s132
      %p136 = pneg %p130
      %p137 = scmp.eq.s32.totalorder %s16, 1
      %p138 = por %p136, %p137
      %p139 = scmp.ne.s32.totalorder %s131, %s134
      %p140 = scmp.eq.s32.totalorder %s16, 0
      %p141 = por %p139, %p140
      %p142 = scmp.ne.s32.totalorder %s131, %s134
      %p143 = scmp.eq.s32.totalorder %s21, 1
      %p144 = por %p142, %p143
      %p145 = scmp.ne.s32.totalorder %s134, %s135
      %p146 = scmp.eq.s32.totalorder %s21, 0
      %p147 = por %p145, %p146
      %p148 = scmp.ne.s32.totalorder %s134, %s135
      %p149 = scmp.eq.s32.totalorder %s22, 1
      %p150 = por %p148, %p149
      %p152 = scmp.ne.s32.totalorder %s135, %s151
      %p153 = scmp.eq.s32.totalorder %s22, 0
      %p154 = por %p152, %p153
      %p155 = scmp.le.s32.totalorder 1, %s16
      %p156 = scmp.lt.s32.totalorder %s16, 3
      %p157 = pnand %p155, %p156
      %p158 = pneg %p157
      // Predicated region
      $region9: #{tpu_custom_call.1} parent=5 // pred_check
        _
      $region10: #{tpu_custom_call.1} parent=5 // pred_check_branch
        %160 = sbr.rel (%p157) target = $region12
      $region11: #{tpu_custom_call.1} parent=5 // pred_region
        %s161 = ssub.s32 %s16, 1
        // Predicated region
        $region13: #{tpu_custom_call.1} parent=11 // pred_check
          %p162 = pneg %p77
        $region14: #{tpu_custom_call.1} parent=11 // pred_check_branch
          %164 = sbr.rel (%p162) target = $region16
        $region15: #{tpu_custom_call.1} parent=11 // pred_region
          _
        $region16: #{tpu_custom_call.1} parent=11 // pred_fallthru
          _
        // Predicated region
        $region17: #{tpu_custom_call.1} parent=11 // pred_check
          %p165 = pneg %p98
        $region18: #{tpu_custom_call.1} parent=11 // pred_check_branch
          %167 = sbr.rel (%p165) target = $region20
        $region19: #{tpu_custom_call.1} parent=11 // pred_region
          _
        $region20: #{tpu_custom_call.1} parent=11 // pred_fallthru
          _
        // Predicated region
        $region21: #{tpu_custom_call.1} parent=11 // pred_check
          %p168 = pneg %p119
        $region22: #{tpu_custom_call.1} parent=11 // pred_check_branch
          %170 = sbr.rel (%p168) target = $region24
        $region23: #{tpu_custom_call.1} parent=11 // pred_region
          _
        $region24: #{tpu_custom_call.1} parent=11 // pred_fallthru
          _
      $region12: #{tpu_custom_call.1} parent=5 // pred_fallthru
        _
      %p171 = scmp.lt.s32.totalorder %s16, 2
      // Predicated region
      $region25: #{tpu_custom_call.1} parent=5 // pred_check
        %p172 = pneg %p171
      $region26: #{tpu_custom_call.1} parent=5 // pred_check_branch
        %174 = sbr.rel (%p172) target = $region28
      $region27: #{tpu_custom_call.1} parent=5 // pred_region
        // Predicated region
        $region29: #{tpu_custom_call.1} parent=27 // pred_check
          %p175 = pneg %p50
        $region30: #{tpu_custom_call.1} parent=27 // pred_check_branch
          %177 = sbr.rel (%p175) target = $region32
        $region31: #{tpu_custom_call.1} parent=27 // pred_region
          %s178 = sand.u32 %s40, 1
          %s179 = scalar_lea.sflag [#allocation3], %s178
          %s180 = sand.u32 %s40, 1
          %s181 = smul.addr %s180, 128
          %s182 = scalar_lea.vmem [#allocation2], %s181
          %s183 = smul.u32 2, %s24
          %s185 = ssub.s32 2048, 2048
          %186 = vsyncadd %s179, %s185
          %s187 = smul.addr %s23, 16
          %s188 = sadd.s32 %s183, %s187
          %s189 = smul.addr %s188, 128
          %s190 = scalar_lea.hbm %s0, %s189
          %s191 = sshll.u32 %s182, 4
          %s192 = int_to_ptr.vmem [resolvable:$true] %s191
          %197 = dma.hbm_to_vmem [thread:$0]  %s190, 2048, %s192, %s179, 256, 256, 16
        $region32: #{tpu_custom_call.1} parent=27 // pred_fallthru
          _
      $region28: #{tpu_custom_call.1} parent=5 // pred_fallthru
        _
      %p198 = scmp.le.s32.totalorder 1, %s16
      %p199 = scmp.lt.s32.totalorder %s16, 3
      %p200 = pnand %p198, %p199
      %p201 = pneg %p200
      // Predicated region
      $region33: #{tpu_custom_call.1} parent=5 // pred_check
        _
      $region34: #{tpu_custom_call.1} parent=5 // pred_check_branch
        %203 = sbr.rel (%p200) target = $region36
      $region35: #{tpu_custom_call.1} parent=5 // pred_region
        %s204 = ssub.s32 %s16, 1
        %s205 = sand.u32 %s43, 1
        %s206 = scalar_lea.sflag [#allocation3], %s205
        %s207 = sand.u32 %s43, 1
        %s208 = smul.addr %s207, 128
        %s209 = scalar_lea.vmem [#allocation2], %s208
        // Predicated region
        $region37: #{tpu_custom_call.1} parent=35 // pred_check
          %p210 = pneg %p56
        $region38: #{tpu_custom_call.1} parent=35 // pred_check_branch
          %212 = sbr.rel (%p210) target = $region40
        $region39: #{tpu_custom_call.1} parent=35 // pred_region
          %213 = dma.done %s206, 2048
        $region40: #{tpu_custom_call.1} parent=35 // pred_fallthru
          _
        %s214 = sand.u32 %s43, 1
        %s215 = scalar_lea.sflag [#allocation3], %s214
        %s216 = sand.u32 %s43, 1
        %s217 = smul.addr %s216, 128
        %s218 = scalar_lea.vmem [#allocation2], %s217
        %p219 = pneg %p56
        %p220 = pneg %p53
        %p221 = pneg %p77
        %p222 = pneg %p74
        %p223 = pneg %p98
        %p224 = pneg %p95
        %p225 = pneg %p119
        %p226 = pneg %p116
        %p227 = pneg %p147
        %p228 = pneg %p144
        %s229 = sand.u32 %s134, 1
        %s230 = scalar_lea.sflag [#allocation4], %s229
        %s231 = sand.u32 %s134, 1
        %s232 = smul.addr %s231, 128
        %s233 = scalar_lea.vmem [#allocation5], %s232
        %s234 = smul.u32 2, %s26
        %s235 = smul.u32 2, %s26
        %v236 = vld [vmem:[%s209] sm:$0xff]
        %v237 = vld [vmem:[%s209 + $0x8] sm:$0xff]
        %v238 = vld [vmem:[%s209 + $0x10] sm:$0xff]
        %v239 = vld [vmem:[%s209 + $0x18] sm:$0xff]
        %v240 = vld [vmem:[%s209 + $0x20] sm:$0xff]
        %v241 = vld [vmem:[%s209 + $0x28] sm:$0xff]
        %v242 = vld [vmem:[%s209 + $0x30] sm:$0xff]
        %v243 = vld [vmem:[%s209 + $0x38] sm:$0xff]
        %v244 = vld [vmem:[%s209 + $0x40] sm:$0xff]
        %v245 = vld [vmem:[%s209 + $0x48] sm:$0xff]
        %v246 = vld [vmem:[%s209 + $0x50] sm:$0xff]
        %v247 = vld [vmem:[%s209 + $0x58] sm:$0xff]
        %v248 = vld [vmem:[%s209 + $0x60] sm:$0xff]
        %v249 = vld [vmem:[%s209 + $0x68] sm:$0xff]
        %v250 = vld [vmem:[%s209 + $0x70] sm:$0xff]
        %v251 = vld [vmem:[%s209 + $0x78] sm:$0xff]
        %v252 = vld [vmem:[%s1] sm:$0xff]
        %v253 = vld [vmem:[%s2] sm:$0xff]
        %255 = vset.pattern.permute.xlu0 0
        %256 = vperm.xlu0 %255, %v253
        %v257 = vpop.permute.xlu0 %256
        %vm259 = vcmask 523264
        %v261 = vsel %vm259, %v252, 0
        %263 = vmatprep.subr.mxu0 %v237
        %264 = vmatpush1.msra.mxu0 %v236
        %265 = vmatprep.subr.mxu0 %v239
        %266 = vmatpush1.msra.mxu0 %v238
        %267 = vmatprep.subr.mxu0 %v241
        %268 = vmatpush1.msra.mxu0 %v240
        %269 = vmatprep.subr.mxu0 %v243
        %270 = vmatpush1.msra.mxu0 %v242
        %271 = vmatprep.subr.mxu0 %v245
        %272 = vmatpush1.msra.mxu0 %v244
        %273 = vmatprep.subr.mxu0 %v247
        %274 = vmatpush1.msra.mxu0 %v246
        %275 = vmatprep.subr.mxu0 %v249
        %276 = vmatpush1.msra.mxu0 %v248
        %277 = vmatprep.subr.mxu0 %v251
        %278 = vmatpush1.msra.mxu0 %v250
        %279 = vmatprep.subr.mxu0 0.0
        %280 = vmatpush1.msra.mxu0 0.0
        %281 = vmatprep.subr.mxu0 0.0
        %282 = vmatpush1.msra.mxu0 0.0
        %283 = vmatprep.subr.mxu0 0.0
        %284 = vmatpush1.msra.mxu0 0.0
        %285 = vmatprep.subr.mxu0 0.0
        %286 = vmatpush1.msra.mxu0 0.0
        %287 = vmatprep.subr.mxu0 0.0
        %288 = vmatpush1.msra.mxu0 0.0
        %289 = vmatprep.subr.mxu0 0.0
        %290 = vmatpush1.msra.mxu0 0.0
        %291 = vmatprep.subr.mxu0 0.0
        %292 = vmatpush1.msra.mxu0 0.0
        %293 = vmatprep.subr.mxu0 0.0
        %294 = vmatpush1.msra.mxu0 0.0
        %295 = vmatprep.subr.mxu0 0.0
        %296 = vmatpush1.msra.mxu0 0.0
        %297 = vmatprep.subr.mxu0 0.0
        %298 = vmatpush1.msra.mxu0 0.0
        %299 = vmatprep.subr.mxu0 0.0
        %300 = vmatpush1.msra.mxu0 0.0
        %301 = vmatprep.subr.mxu0 0.0
        %302 = vmatpush1.msra.mxu0 0.0
        %303 = vmatprep.subr.mxu0 0.0
        %304 = vmatpush1.msra.mxu0 0.0
        %305 = vmatprep.subr.mxu0 0.0
        %306 = vmatpush1.msra.mxu0 0.0
        %307 = vmatprep.subr.mxu0 0.0
        %308 = vmatpush1.msra.mxu0 0.0
        %309 = vmatprep.subr.mxu0 0.0
        %310 = vmatpush1.msra.mxu0 0.0
        %311 = vmatprep.subr.mxu0 0.0
        %312 = vmatpush1.msra.mxu0 0.0
        %313 = vmatprep.subr.mxu0 0.0
        %314 = vmatpush1.msra.mxu0 0.0
        %315 = vmatprep.subr.mxu0 0.0
        %316 = vmatpush1.msra.mxu0 0.0
        %317 = vmatprep.subr.mxu0 0.0
        %318 = vmatpush1.msra.mxu0 0.0
        %319 = vmatprep.subr.mxu0 0.0
        %320 = vmatpush1.msra.mxu0 0.0
        %321 = vmatprep.subr.mxu0 0.0
        %322 = vmatpush1.msra.mxu0 0.0
        %323 = vmatprep.subr.mxu0 0.0
        %324 = vmatpush1.msra.mxu0 0.0
        %325 = vmatprep.subr.mxu0 0.0
        %326 = vmatpush1.msra.mxu0 0.0
        %327 = vmatprep.mubr.f32.mxu0 0.0
        %328 = vmatmul.mubr.f32.gmra.mrb[0].mxu0 %v261
        %v329 = vpop.f32.mrb[0].mxu0
        %v330 = vadd.f32 %v257, %v329
        %v331 = vpop.f32.mrb[0].mxu0
        %v332 = vadd.f32 %v257, %v331
        %333 = vdwg.mxu0
        %v334 = vmax.f32 %v330, 0.0
        %v335 = vmax.f32 %v332, 0.0
        %v336 = vld [vmem:[%s3] sm:$0xff]
        %v337 = vld [vmem:[%s3 + $0x8] sm:$0xff]
        %v338 = vld [vmem:[%s3 + $0x10] sm:$0xff]
        %v339 = vld [vmem:[%s3 + $0x18] sm:$0xff]
        %v340 = vld [vmem:[%s3 + $0x20] sm:$0xff]
        %v341 = vld [vmem:[%s3 + $0x28] sm:$0xff]
        %v342 = vld [vmem:[%s3 + $0x30] sm:$0xff]
        %v343 = vld [vmem:[%s3 + $0x38] sm:$0xff]
        %vm344 = vcmask 64512
        %v346 = vsel %vm344, %v336, 0
        %v349 = vsel %vm344, %v337, 0
        %v352 = vsel %vm344, %v338, 0
        %v355 = vsel %vm344, %v339, 0
        %v358 = vsel %vm344, %v340, 0
        %v361 = vsel %vm344, %v341, 0
        %v364 = vsel %vm344, %v342, 0
        %v367 = vsel %vm344, %v343, 0
        %369 = vmatprep.subr.mxu0 %v335
        %370 = vmatpush1.msra.mxu0 %v334
        %371 = vmatprep.subr.mxu0 0.0
        %372 = vmatpush1.msra.mxu0 0.0
        %373 = vmatprep.subr.mxu0 0.0
        %374 = vmatpush1.msra.mxu0 0.0
        %375 = vmatprep.subr.mxu0 0.0
        %376 = vmatpush1.msra.mxu0 0.0
        %377 = vmatprep.subr.mxu0 0.0
        %378 = vmatpush1.msra.mxu0 0.0
        %379 = vmatprep.subr.mxu0 0.0
        %380 = vmatpush1.msra.mxu0 0.0
        %381 = vmatprep.subr.mxu0 0.0
        %382 = vmatpush1.msra.mxu0 0.0
        %383 = vmatprep.subr.mxu0 0.0
        %384 = vmatpush1.msra.mxu0 0.0
        %385 = vmatprep.subr.mxu0 0.0
        %386 = vmatpush1.msra.mxu0 0.0
        %387 = vmatprep.subr.mxu0 0.0
        %388 = vmatpush1.msra.mxu0 0.0
        %389 = vmatprep.subr.mxu0 0.0
        %390 = vmatpush1.msra.mxu0 0.0
        %391 = vmatprep.subr.mxu0 0.0
        %392 = vmatpush1.msra.mxu0 0.0
        %393 = vmatprep.subr.mxu0 0.0
        %394 = vmatpush1.msra.mxu0 0.0
        %395 = vmatprep.subr.mxu0 0.0
        %396 = vmatpush1.msra.mxu0 0.0
        %397 = vmatprep.subr.mxu0 0.0
        %398 = vmatpush1.msra.mxu0 0.0
        %399 = vmatprep.subr.mxu0 0.0
        %400 = vmatpush1.msra.mxu0 0.0
        %401 = vmatprep.subr.mxu0 0.0
        %402 = vmatpush1.msra.mxu0 0.0
        %403 = vmatprep.subr.mxu0 0.0
        %404 = vmatpush1.msra.mxu0 0.0
        %405 = vmatprep.subr.mxu0 0.0
        %406 = vmatpush1.msra.mxu0 0.0
        %407 = vmatprep.subr.mxu0 0.0
        %408 = vmatpush1.msra.mxu0 0.0
        %409 = vmatprep.subr.mxu0 0.0
        %410 = vmatpush1.msra.mxu0 0.0
        %411 = vmatprep.subr.mxu0 0.0
        %412 = vmatpush1.msra.mxu0 0.0
        %413 = vmatprep.subr.mxu0 0.0
        %414 = vmatpush1.msra.mxu0 0.0
        %415 = vmatprep.subr.mxu0 0.0
        %416 = vmatpush1.msra.mxu0 0.0
        %417 = vmatprep.subr.mxu0 0.0
        %418 = vmatpush1.msra.mxu0 0.0
        %419 = vmatprep.subr.mxu0 0.0
        %420 = vmatpush1.msra.mxu0 0.0
        %421 = vmatprep.subr.mxu0 0.0
        %422 = vmatpush1.msra.mxu0 0.0
        %423 = vmatprep.subr.mxu0 0.0
        %424 = vmatpush1.msra.mxu0 0.0
        %425 = vmatprep.subr.mxu0 0.0
        %426 = vmatpush1.msra.mxu0 0.0
        %427 = vmatprep.subr.mxu0 0.0
        %428 = vmatpush1.msra.mxu0 0.0
        %429 = vmatprep.subr.mxu0 0.0
        %430 = vmatpush1.msra.mxu0 0.0
        %431 = vmatprep.subr.mxu0 0.0
        %432 = vmatpush1.msra.mxu0 0.0
        %433 = vmatprep.mubr.f32.mxu0 0.0
        %434 = vmatmul.mubr.f32.gmra.mrb[0].mxu0 %v346
        %v435 = vpop.f32.mrb[0].mxu0
        %v436 = vadd.f32 0.0, %v435
        %v437 = vpop.f32.mrb[0].mxu0
        %v438 = vadd.f32 0.0, %v437
        %439 = vmatprep.mubr.f32.mxu0 0.0
        %440 = vmatmul.mubr.f32.gmra.mrb[0].mxu0 %v349
        %v441 = vpop.f32.mrb[0].mxu0
        %v442 = vadd.f32 0.0, %v441
        %v443 = vpop.f32.mrb[0].mxu0
        %v444 = vadd.f32 0.0, %v443
        %445 = vmatprep.mubr.f32.mxu0 0.0
        %446 = vmatmul.mubr.f32.gmra.mrb[0].mxu0 %v352
        %v447 = vpop.f32.mrb[0].mxu0
        %v448 = vadd.f32 0.0, %v447
        %v449 = vpop.f32.mrb[0].mxu0
        %v450 = vadd.f32 0.0, %v449
        %451 = vmatprep.mubr.f32.mxu0 0.0
        %452 = vmatmul.mubr.f32.gmra.mrb[0].mxu0 %v355
        %v453 = vpop.f32.mrb[0].mxu0
        %v454 = vadd.f32 0.0, %v453
        %v455 = vpop.f32.mrb[0].mxu0
        %v456 = vadd.f32 0.0, %v455
        %457 = vmatprep.mubr.f32.mxu0 0.0
        %458 = vmatmul.mubr.f32.gmra.mrb[0].mxu0 %v358
        %v459 = vpop.f32.mrb[0].mxu0
        %v460 = vadd.f32 0.0, %v459
        %v461 = vpop.f32.mrb[0].mxu0
        %v462 = vadd.f32 0.0, %v461
        %463 = vmatprep.mubr.f32.mxu0 0.0
        %464 = vmatmul.mubr.f32.gmra.mrb[0].mxu0 %v361
        %v465 = vpop.f32.mrb[0].mxu0
        %v466 = vadd.f32 0.0, %v465
        %v467 = vpop.f32.mrb[0].mxu0
        %v468 = vadd.f32 0.0, %v467
        %469 = vmatprep.mubr.f32.mxu0 0.0
        %470 = vmatmul.mubr.f32.gmra.mrb[0].mxu0 %v364
        %v471 = vpop.f32.mrb[0].mxu0
        %v472 = vadd.f32 0.0, %v471
        %v473 = vpop.f32.mrb[0].mxu0
        %v474 = vadd.f32 0.0, %v473
        %475 = vmatprep.mubr.f32.mxu0 0.0
        %476 = vmatmul.mubr.f32.gmra.mrb[0].mxu0 %v367
        %v477 = vpop.f32.mrb[0].mxu0
        %v478 = vadd.f32 0.0, %v477
        %v479 = vpop.f32.mrb[0].mxu0
        %v480 = vadd.f32 0.0, %v479
        %481 = vdwg.mxu0
        %v482 = vxor.u32 %v436, 2147483648
        %v483 = vxor.u32 %v438, 2147483648
        %v484 = vxor.u32 %v442, 2147483648
        %v485 = vxor.u32 %v444, 2147483648
        %v486 = vxor.u32 %v448, 2147483648
        %v487 = vxor.u32 %v450, 2147483648
        %v488 = vxor.u32 %v454, 2147483648
        %v489 = vxor.u32 %v456, 2147483648
        %v490 = vxor.u32 %v460, 2147483648
        %v491 = vxor.u32 %v462, 2147483648
        %v492 = vxor.u32 %v466, 2147483648
        %v493 = vxor.u32 %v468, 2147483648
        %v494 = vxor.u32 %v472, 2147483648
        %v495 = vxor.u32 %v474, 2147483648
        %v496 = vxor.u32 %v478, 2147483648
        %v497 = vxor.u32 %v480, 2147483648
        %v498 = vmul.f32 %v482, 1.442695
        %v499 = vpow.pop %v498
        %v500 = vmul.f32 %v483, 1.442695
        %v501 = vpow.pop %v500
        %v502 = vmul.f32 %v484, 1.442695
        %v503 = vpow.pop %v502
        %v504 = vmul.f32 %v485, 1.442695
        %v505 = vpow.pop %v504
        %v506 = vmul.f32 %v486, 1.442695
        %v507 = vpow.pop %v506
        %v508 = vmul.f32 %v487, 1.442695
        %v509 = vpow.pop %v508
        %v510 = vmul.f32 %v488, 1.442695
        %v511 = vpow.pop %v510
        %v512 = vmul.f32 %v489, 1.442695
        %v513 = vpow.pop %v512
        %v514 = vmul.f32 %v490, 1.442695
        %v515 = vpow.pop %v514
        %v516 = vmul.f32 %v491, 1.442695
        %v517 = vpow.pop %v516
        %v518 = vmul.f32 %v492, 1.442695
        %v519 = vpow.pop %v518
        %v520 = vmul.f32 %v493, 1.442695
        %v521 = vpow.pop %v520
        %v522 = vmul.f32 %v494, 1.442695
        %v523 = vpow.pop %v522
        %v524 = vmul.f32 %v495, 1.442695
        %v525 = vpow.pop %v524
        %v526 = vmul.f32 %v496, 1.442695
        %v527 = vpow.pop %v526
        %v528 = vmul.f32 %v497, 1.442695
        %v529 = vpow.pop %v528
        %v530 = vadd.f32 %v499, 1.0
        %v531 = vadd.f32 %v501, 1.0
        %v532 = vadd.f32 %v503, 1.0
        %v533 = vadd.f32 %v505, 1.0
        %v534 = vadd.f32 %v507, 1.0
        %v535 = vadd.f32 %v509, 1.0
        %v536 = vadd.f32 %v511, 1.0
        %v537 = vadd.f32 %v513, 1.0
        %v538 = vadd.f32 %v515, 1.0
        %v539 = vadd.f32 %v517, 1.0
        %v540 = vadd.f32 %v519, 1.0
        %v541 = vadd.f32 %v521, 1.0
        %v542 = vadd.f32 %v523, 1.0
        %v543 = vadd.f32 %v525, 1.0
        %v544 = vadd.f32 %v527, 1.0
        %v545 = vadd.f32 %v529, 1.0
        %v546 = vrcp.pop %v530
        %v547 = vmul.f32 1.0, %v546
        %v548 = vrcp.pop %v531
        %v549 = vmul.f32 1.0, %v548
        %v550 = vrcp.pop %v532
        %v551 = vmul.f32 1.0, %v550
        %v552 = vrcp.pop %v533
        %v553 = vmul.f32 1.0, %v552
        %v554 = vrcp.pop %v534
        %v555 = vmul.f32 1.0, %v554
        %v556 = vrcp.pop %v535
        %v557 = vmul.f32 1.0, %v556
        %v558 = vrcp.pop %v536
        %v559 = vmul.f32 1.0, %v558
        %v560 = vrcp.pop %v537
        %v561 = vmul.f32 1.0, %v560
        %v562 = vrcp.pop %v538
        %v563 = vmul.f32 1.0, %v562
        %v564 = vrcp.pop %v539
        %v565 = vmul.f32 1.0, %v564
        %v566 = vrcp.pop %v540
        %v567 = vmul.f32 1.0, %v566
        %v568 = vrcp.pop %v541
        %v569 = vmul.f32 1.0, %v568
        %v570 = vrcp.pop %v542
        %v571 = vmul.f32 1.0, %v570
        %v572 = vrcp.pop %v543
        %v573 = vmul.f32 1.0, %v572
        %v574 = vrcp.pop %v544
        %v575 = vmul.f32 1.0, %v574
        %v576 = vrcp.pop %v545
        %v577 = vmul.f32 1.0, %v576
        %578 = vst [vmem:[%s233] sm:$0xff] %v547
        %579 = vst [vmem:[%s233 + $0x8] sm:$0xff] %v549
        %580 = vst [vmem:[%s233 + $0x10] sm:$0xff] %v551
        %581 = vst [vmem:[%s233 + $0x18] sm:$0xff] %v553
        %582 = vst [vmem:[%s233 + $0x20] sm:$0xff] %v555
        %583 = vst [vmem:[%s233 + $0x28] sm:$0xff] %v557
        %584 = vst [vmem:[%s233 + $0x30] sm:$0xff] %v559
        %585 = vst [vmem:[%s233 + $0x38] sm:$0xff] %v561
        %586 = vst [vmem:[%s233 + $0x40] sm:$0xff] %v563
        %587 = vst [vmem:[%s233 + $0x48] sm:$0xff] %v565
        %588 = vst [vmem:[%s233 + $0x50] sm:$0xff] %v567
        %589 = vst [vmem:[%s233 + $0x58] sm:$0xff] %v569
        %590 = vst [vmem:[%s233 + $0x60] sm:$0xff] %v571
        %591 = vst [vmem:[%s233 + $0x68] sm:$0xff] %v573
        %592 = vst [vmem:[%s233 + $0x70] sm:$0xff] %v575
        %593 = vst [vmem:[%s233 + $0x78] sm:$0xff] %v577
        %s594 = sand.u32 %s134, 1
        %s595 = scalar_lea.sflag [#allocation4], %s594
        %s596 = sand.u32 %s134, 1
        %s597 = smul.addr %s596, 128
        %s598 = scalar_lea.vmem [#allocation5], %s597
        // Predicated region
        $region41: #{tpu_custom_call.1} parent=35 // pred_check
          %p599 = pneg %p144
        $region42: #{tpu_custom_call.1} parent=35 // pred_check_branch
          %601 = sbr.rel (%p599) target = $region44
        $region43: #{tpu_custom_call.1} parent=35 // pred_region
          %s602 = smul.u32 2, %s26
          %s604 = ssub.s32 2048, 2048
          %605 = vsyncadd %s595, %s604
          %s606 = smul.addr %s25, 16
          %s607 = sadd.s32 %s602, %s606
          %s608 = smul.addr %s607, 128
          %s609 = scalar_lea.hbm %s4, %s608
          %s610 = sshll.u32 %s598, 4
          %s611 = int_to_ptr.vmem [resolvable:$true] %s610
          %616 = dma.vmem_to_hbm [thread:$0]  %s611, 2048, %s609, %s595, 256, 256, 16
        $region44: #{tpu_custom_call.1} parent=35 // pred_fallthru
          _
      $region36: #{tpu_custom_call.1} parent=5 // pred_fallthru
        _
      %p617 = scmp.le.s32.totalorder 2, %s16
      // Predicated region
      $region45: #{tpu_custom_call.1} parent=5 // pred_check
        %p618 = pneg %p617
      $region46: #{tpu_custom_call.1} parent=5 // pred_check_branch
        %620 = sbr.rel (%p618) target = $region48
      $region47: #{tpu_custom_call.1} parent=5 // pred_region
        %s621 = ssub.s32 %s16, 2
        // Predicated region
        $region49: #{tpu_custom_call.1} parent=47 // pred_check
          %p622 = pneg %p150
        $region50: #{tpu_custom_call.1} parent=47 // pred_check_branch
          %624 = sbr.rel (%p622) target = $region52
        $region51: #{tpu_custom_call.1} parent=47 // pred_region
          %s625 = sand.u32 %s135, 1
          %s626 = scalar_lea.sflag [#allocation4], %s625
          %s627 = sand.u32 %s135, 1
          %s628 = smul.addr %s627, 128
          %s629 = scalar_lea.vmem [#allocation5], %s628
          %630 = dma.done %s626, 2048
        $region52: #{tpu_custom_call.1} parent=47 // pred_fallthru
          _
      $region48: #{tpu_custom_call.1} parent=5 // pred_fallthru
        _
    $region6: #{tpu_custom_call.1} parent=1 // loop_footer
      %s20 = sadd.s32 1, %s16
    $region7: #{tpu_custom_call.1} parent=1 // loop_footer_branch
      %15 = sbr.rel target = $region3
    $region8: #{tpu_custom_call.1} parent=1 // loop_exit
      _
    %631 = vsyncpa [#allocation3], 1
    %s632 = scalar_lea.sflag [#allocation3], 1
    %633 = vsyncpa %s632, 1
    %634 = vsyncpa [#allocation4], 1
    %s635 = scalar_lea.sflag [#allocation4], 1
    %636 = vsyncpa %s635, 1

</llo_original>
